<compile_context>
chip_gen: v6e
topology: v6e:2x2x1
jax: 0.10.0
libtpu: 0.0.40
codegen_flags: <defaults>
</compile_context>

<pallas_src>
import jax
import jax.numpy as jnp
from jax.experimental import pallas as pl
from jax.experimental.pallas import tpu as pltpu

BN_EPS = 1e-5
HIDDEN = 20


def _round_up(x, m):
    return (x + m - 1) // m * m


def mlp_kernel(x_ref, w1_ref, b1_ref, w2_ref, b2_ref, o_ref):
    # Layer 1 + folded BatchNorm: (TILE_B, F) @ (F, 20) on the MXU, f32 accumulate.
    h = jnp.dot(x_ref[...], w1_ref[...], preferred_element_type=jnp.float32)
    # Folded BN shift as bias + ReLU; Dropout(0.5) is identity in eval mode.
    h = jnp.maximum(h + b1_ref[...], 0.0)                        # (TILE_B, 20)
    # Layer 2 written trans-B so the result is directly the lane-dense (1, TILE_B)
    # slab — no in-kernel relayout, no masked partial stores for 128-multiple tiles.
    y = jax.lax.dot_general(
        w2_ref[...], h,                                          # (1,20) . (TILE_B,20)^T
        (((1,), (1,)), ((), ())),
        preferred_element_type=jnp.float32)                      # (1, TILE_B)
    o_ref[...] = y + b2_ref[...]


def fold_bn_params(params):
    """Fold eval-mode BatchNorm1d into the first linear layer (exact in f32)."""
    w1, gamma, beta, mean, var, w2, b2 = params
    scale = gamma * jax.lax.rsqrt(var + BN_EPS)     # (1, H)
    w1_eff = w1 * scale                             # (F, H), per-column scale
    b1_eff = beta - mean * scale                    # (1, H)
    w2_row = w2.T                                   # (1, H)  lane-dense row
    return w1_eff, b1_eff, w2_row, b2               # b2 is (1, 1)


def _choose_tile(batch, max_tile):
    """Pick (tile_b, padded_batch).

    Single exact tile (multiple of 8) when it fits; otherwise a 128-multiple tile
    sized to spread the batch evenly across the fewest tiles (minimizes pad waste
    while keeping the (1, tile_b) output slab fully lane-dense / unmasked).
    """
    b8 = _round_up(batch, 8)
    if b8 <= max_tile:
        return b8, b8                                  # block == full dim, always legal
    n_tiles = pl.cdiv(b8, max_tile)
    tile = _round_up(pl.cdiv(b8, n_tiles), 128)
    return tile, _round_up(b8, tile)


def mlp_net_forward(x, params, *, max_tile_b=1024):
    w1_eff, b1_eff, w2_row, b2 = fold_bn_params(params)
    B, F = x.shape
    H = w1_eff.shape[1]

    tile_b, b_pad = _choose_tile(B, max_tile_b)
    if b_pad != B:
        x = jnp.pad(x, ((0, b_pad - B), (0, 0)))       # padded rows sliced off below
    grid = (b_pad // tile_b,)

    flops = 2 * b_pad * F * H + 2 * b_pad * H
    bytes_accessed = (b_pad * F + b_pad + F * H + 2 * H + 1) * 4

    out_row = pl.pallas_call(
        mlp_kernel,
        out_shape=jax.ShapeDtypeStruct((1, b_pad), jnp.float32),
        grid=grid,
        in_specs=[
            pl.BlockSpec((tile_b, F), lambda i: (i, 0)),   # streamed, double-buffered
            pl.BlockSpec((F, H), lambda i: (0, 0)),        # resident weights
            pl.BlockSpec((1, H), lambda i: (0, 0)),
            pl.BlockSpec((1, H), lambda i: (0, 0)),
            pl.BlockSpec((1, 1), lambda i: (0, 0)),
        ],
        out_specs=pl.BlockSpec((1, tile_b), lambda i: (0, i)),   # lane-dense slab
        compiler_params=pltpu.CompilerParams(
            dimension_semantics=("parallel",)),                  # 2 TCs on v7x
        cost_estimate=pl.CostEstimate(
            flops=flops, transcendentals=0, bytes_accessed=bytes_accessed),
    )(x, w1_eff, b1_eff, w2_row, b2)

    return out_row[0, :B].reshape(B, 1)


def init_params(key, in_features, hidden=HIDDEN):
    k1, k2, k3 = jax.random.split(key, 3)
    # Linear(in_features, hidden, bias=False): weight stored transposed as (F, H).
    bound1 = 1.0 / jnp.sqrt(in_features)
    w1 = jax.random.uniform(k1, (in_features, hidden), jnp.float32,
                            -bound1, bound1)
    # BatchNorm1d(hidden): affine params + nontrivial running stats.
    gamma = jnp.ones((1, hidden), jnp.float32)
    beta = jnp.zeros((1, hidden), jnp.float32)
    mean = 0.1 * jax.random.normal(k2, (1, hidden), jnp.float32)
    var = jnp.ones((1, hidden), jnp.float32) + 0.05 * jnp.abs(
        jax.random.normal(k3, (1, hidden), jnp.float32))
    # Linear(hidden, 1): weight stored as (H, 1), bias as (1, 1).
    bound2 = 1.0 / jnp.sqrt(hidden)
    kw, kb = jax.random.split(k1)
    w2 = jax.random.uniform(kw, (hidden, 1), jnp.float32, -bound2, bound2)
    b2 = jax.random.uniform(kb, (1, 1), jnp.float32, -bound2, bound2)
    return (w1, gamma, beta, mean, var, w2, b2)


def reference_forward(x, params):
    w1, gamma, beta, mean, var, w2, b2 = params
    h = x @ w1
    h = (h - mean) * jax.lax.rsqrt(var + BN_EPS) * gamma + beta
    h = jnp.maximum(h, 0.0)
    return h @ w2 + b2


if __name__ == "__main__":
    key = jax.random.PRNGKey(0)
    k_x, k_p, k_x2, k_x3 = jax.random.split(key, 4)

    # Small shapes consistent with the module: batch=8, input features=32.
    B, F = 8, 32
    x = jax.random.normal(k_x, (B, F), jnp.float32)
    params = init_params(k_p, F)

    out = mlp_net_forward(x, params)
    jax.block_until_ready(out)
    ref = reference_forward(x, params)
    assert out.shape == (B, 1)
    assert jnp.allclose(out, ref, atol=1e-4, rtol=1e-4)

    # Single-tile, exact-size path (no padding waste): batch fits one tile.
    B2 = 600
    x2 = jax.random.normal(k_x2, (B2, F), jnp.float32)
    out2 = mlp_net_forward(x2, params)          # tile_b = 600, grid = (1,)
    jax.block_until_ready(out2)
    ref2 = reference_forward(x2, params)
    assert out2.shape == (B2, 1)
    assert jnp.allclose(out2, ref2, atol=1e-4, rtol=1e-4)

    # Multi-tile streamed path with batch padding (the real perf path).
    B3 = 2600
    x3 = jax.random.normal(k_x3, (B3, F), jnp.float32)
    out3 = mlp_net_forward(x3, params)          # tile_b = 896, grid = (3,), pad -> 2688
    jax.block_until_ready(out3)
    ref3 = reference_forward(x3, params)
    assert out3.shape == (B3, 1)
    assert jnp.allclose(out3, ref3, atol=1e-4, rtol=1e-4)

    print("KERNEL_OK")
</pallas_src>

<mosaic_0001>
module attributes {stable_mosaic.version = 11 : i64} {
  func.func @mlp_kernel(%arg0: i32, %arg1: memref<8x32xf32, #tpu.memory_space<vmem>>, %arg2: memref<32x20xf32, #tpu.memory_space<vmem>>, %arg3: memref<1x20xf32, #tpu.memory_space<vmem>>, %arg4: memref<1x20xf32, #tpu.memory_space<vmem>>, %arg5: memref<1x1xf32, #tpu.memory_space<vmem>>, %arg6: memref<1x8xf32, #tpu.memory_space<vmem>>) attributes {dimension_semantics = [#tpu.dimension_semantics<parallel>], iteration_bounds = array<i64: 1>, scalar_prefetch = 0 : i64, scratch_operands = 0 : i64, tpu.core_type = #tpu.core_type<tc>, window_params = [{transform_indices = @transform_0, window_bounds = array<i64: 8, 32>}, {pipeline_mode = #tpu.pipeline_mode<synchronous>, transform_indices = @transform_1, window_bounds = array<i64: 32, 20>}, {pipeline_mode = #tpu.pipeline_mode<synchronous>, transform_indices = @transform_2, window_bounds = array<i64: 1, 20>}, {pipeline_mode = #tpu.pipeline_mode<synchronous>, transform_indices = @transform_3, window_bounds = array<i64: 1, 20>}, {pipeline_mode = #tpu.pipeline_mode<synchronous>, transform_indices = @transform_4, window_bounds = array<i64: 1, 1>}, {transform_indices = @transform_5, window_bounds = array<i64: 1, 8>}]} {
    %c0 = arith.constant 0 : index
    %c0_0 = arith.constant 0 : index
    %0 = vector.load %arg1[%c0, %c0_0] : memref<8x32xf32, #tpu.memory_space<vmem>>, vector<8x32xf32>
    %c0_1 = arith.constant 0 : index
    %c0_2 = arith.constant 0 : index
    %1 = vector.load %arg2[%c0_1, %c0_2] : memref<32x20xf32, #tpu.memory_space<vmem>>, vector<32x20xf32>
    %cst = arith.constant dense<0.000000e+00> : vector<8x20xf32>
    %2 = tpu.matmul %0, %1, %cst {dimension_numbers = #tpu.dot_dimension_numbers<[1], [0], [0], [1], [0, 0, 1, 1], [], []>} : vector<8x32xf32>, vector<32x20xf32>, vector<8x20xf32> -> vector<8x20xf32>
    %c0_3 = arith.constant 0 : index
    %c0_4 = arith.constant 0 : index
    %3 = vector.load %arg3[%c0_3, %c0_4] : memref<1x20xf32, #tpu.memory_space<vmem>>, vector<1x20xf32>
    %4 = vector.broadcast %3 : vector<1x20xf32> to vector<8x20xf32>
    %5 = arith.addf %2, %4 : vector<8x20xf32>
    %cst_5 = arith.constant 0.000000e+00 : f32
    %6 = vector.broadcast %cst_5 : f32 to vector<8x20xf32>
    %7 = arith.maximumf %5, %6 : vector<8x20xf32>
    %c0_6 = arith.constant 0 : index
    %c0_7 = arith.constant 0 : index
    %8 = vector.load %arg4[%c0_6, %c0_7] : memref<1x20xf32, #tpu.memory_space<vmem>>, vector<1x20xf32>
    %cst_8 = arith.constant dense<0.000000e+00> : vector<1x8xf32>
    %9 = tpu.matmul %8, %7, %cst_8 {dimension_numbers = #tpu.dot_dimension_numbers<[1], [1], [0], [0], [0, 0, 1, 0], [], []>} : vector<1x20xf32>, vector<8x20xf32>, vector<1x8xf32> -> vector<1x8xf32>
    %c0_9 = arith.constant 0 : index
    %c0_10 = arith.constant 0 : index
    %10 = vector.load %arg5[%c0_9, %c0_10] : memref<1x1xf32, #tpu.memory_space<vmem>>, vector<1x1xf32>
    %11 = vector.broadcast %10 : vector<1x1xf32> to vector<1x8xf32>
    %12 = arith.addf %9, %11 : vector<1x8xf32>
    %c0_11 = arith.constant 0 : index
    %c0_12 = arith.constant 0 : index
    %13 = vector.load %arg6[%c0_11, %c0_12] : memref<1x8xf32, #tpu.memory_space<vmem>>, vector<1x8xf32>
    tpu.vector_store %arg6[%c0_11, %c0_12], %12 {strides = array<i32>} : memref<1x8xf32, #tpu.memory_space<vmem>>, vector<1x8xf32>,
    return
  }
  func.func @transform_0(%arg0: i32) -> (i32, i32) {
    %c0_i32 = arith.constant 0 : i32
    %c0_i32_0 = arith.constant 0 : i32
    return %arg0, %c0_i32 : i32, i32
  }
  func.func @transform_1(%arg0: i32) -> (i32, i32) {
    %c0_i32 = arith.constant 0 : i32
    %c0_i32_0 = arith.constant 0 : i32
    %c0_i32_1 = arith.constant 0 : i32
    return %c0_i32, %c0_i32_0 : i32, i32
  }
  func.func @transform_2(%arg0: i32) -> (i32, i32) {
    %c0_i32 = arith.constant 0 : i32
    %c0_i32_0 = arith.constant 0 : i32
    %c0_i32_1 = arith.constant 0 : i32
    return %c0_i32, %c0_i32_0 : i32, i32
  }
  func.func @transform_3(%arg0: i32) -> (i32, i32) {
    %c0_i32 = arith.constant 0 : i32
    %c0_i32_0 = arith.constant 0 : i32
    %c0_i32_1 = arith.constant 0 : i32
    return %c0_i32, %c0_i32_0 : i32, i32
  }
  func.func @transform_4(%arg0: i32) -> (i32, i32) {
    %c0_i32 = arith.constant 0 : i32
    %c0_i32_0 = arith.constant 0 : i32
    %c0_i32_1 = arith.constant 0 : i32
    return %c0_i32, %c0_i32_0 : i32, i32
  }
  func.func @transform_5(%arg0: i32) -> (i32, i32) {
    %c0_i32 = arith.constant 0 : i32
    %c0_i32_0 = arith.constant 0 : i32
    return %c0_i32, %arg0 : i32, i32
  }
}

</mosaic_0001>

<llo_original>
// kernel: tpu_custom_call.1
$region0: #{tpu_custom_call.1}
  #allocation0 [shape = 'u32[]', space=smem, size = 0x4, offset = 0x4, fixed_abs, tag = 'smem constant byte address 0x4 - core index']
  #allocation1 [shape = 'u32[144,128]{1,0:T(1,128)}', space=vmem, size = 0x12000, scoped, tag = 'internal scratch']
  #allocation2 [shape = 'f32[1,1]{1,0:T(1,128)S(1)}', space=vmem, size = 0x200, scoped, tag = 'scoped memory for tpu_custom_call.1']
  %s0 = inlined_call_operand.vmem [shape: f32[8,32], index: 0, kind: input, shape index: {}]
  %s1 = inlined_call_operand.vmem [shape: f32[32,20], index: 1, kind: input, shape index: {}]
  %s2 = inlined_call_operand.vmem [shape: f32[1,20], index: 2, kind: input, shape index: {}]
  %s3 = inlined_call_operand.vmem [shape: f32[1,20], index: 3, kind: input, shape index: {}]
  %s4 = inlined_call_operand.<no memory space> [shape: f32[1,1], index: 4, kind: input, shape index: {}]
  %s5 = inlined_call_operand.hbm [shape: f32[1,8], index: 5, kind: output, shape index: {}]
  %s6 = sld [smem:[#allocation0]]
  $region30: #{tpu_custom_call.1} parent=0
    _
  %s8 = ssub.s32 1, %s6
  %s9 = scalar_select 0, %s8, %s6
  %v10 = vstv %s4
  %11 = vst [vmem:[#allocation2] sm:$0x1] %v10
  $region1: #{tpu_custom_call.1} parent=0
    #allocation3 [shape = 'u8[512]{0}', space=vmem, size = 0x400, scoped, tag = 'output window, operand 0, single buffered']
    #allocation4 [shape = 's32[1]{0}', space=sflag, size = 0x4, scoped, tag = 'scoped memory for tpu_custom_call.1']
    %12 = vsyncpa [#allocation4], 0
    // Predicated region
    $region2: #{tpu_custom_call.1} parent=1 // pred_check
      _
    $region3: #{tpu_custom_call.1} parent=1 // pred_check_branch
      %14 = sbr.rel (0) target = $region5
    $region4: #{tpu_custom_call.1} parent=1 // pred_region
      _
    $region5: #{tpu_custom_call.1} parent=1 // pred_fallthru
      _
    // Predicated region
    $region6: #{tpu_custom_call.1} parent=1 // pred_check
      _
    $region7: #{tpu_custom_call.1} parent=1 // pred_check_branch
      %16 = sbr.rel (0) target = $region9
    $region8: #{tpu_custom_call.1} parent=1 // pred_region
      _
    $region9: #{tpu_custom_call.1} parent=1 // pred_fallthru
      _
    // Predicated region
    $region10: #{tpu_custom_call.1} parent=1 // pred_check
      _
    $region11: #{tpu_custom_call.1} parent=1 // pred_check_branch
      %18 = sbr.rel (0) target = $region13
    $region12: #{tpu_custom_call.1} parent=1 // pred_region
      _
    $region13: #{tpu_custom_call.1} parent=1 // pred_fallthru
      _
    // Predicated region
    $region14: #{tpu_custom_call.1} parent=1 // pred_check
      _
    $region15: #{tpu_custom_call.1} parent=1 // pred_check_branch
      %20 = sbr.rel (0) target = $region17
    $region16: #{tpu_custom_call.1} parent=1 // pred_region
      _
    $region17: #{tpu_custom_call.1} parent=1 // pred_fallthru
      _
    // Predicated region
    $region18: #{tpu_custom_call.1} parent=1 // pred_check
      _
    $region19: #{tpu_custom_call.1} parent=1 // pred_check_branch
      %22 = sbr.rel (0) target = $region21
    $region20: #{tpu_custom_call.1} parent=1 // pred_region
      _
    $region21: #{tpu_custom_call.1} parent=1 // pred_fallthru
      _
    %v23 = vld [vmem:[%s0] sm:$0xff]
    %v24 = vld [vmem:[%s1] sm:$0xff]
    %v25 = vld [vmem:[%s1 + $0x8] sm:$0xff]
    %v26 = vld [vmem:[%s1 + $0x10] sm:$0xff]
    %v27 = vld [vmem:[%s1 + $0x18] sm:$0xff]
    %v28 = vld [vmem:[%s2] sm:$0x1]
    %v30 = vlaneseq
    %v31 = vshrl.u32 %v30, 7
    %v32 = vsub.s32 0, %v31
    %v33 = vrot.slane %v28, %v32
    %vm35 = vcmask 261120
    %v37 = vsel %vm35, %v23, 0
    %39 = vmatprep.subr.mxu0 0.0
    %40 = vmatpush1.msra.mxu0 0.0
    %41 = vmatprep.subr.mxu0 0.0
    %42 = vmatpush1.msra.mxu0 0.0
    %43 = vmatprep.subr.mxu0 0.0
    %44 = vmatpush1.msra.mxu0 0.0
    %45 = vmatprep.subr.mxu0 0.0
    %46 = vmatpush1.msra.mxu0 0.0
    %47 = vmatprep.subr.mxu0 0.0
    %48 = vmatpush1.msra.mxu0 0.0
    %49 = vmatprep.subr.mxu0 0.0
    %50 = vmatpush1.msra.mxu0 0.0
    %51 = vmatprep.subr.mxu0 0.0
    %52 = vmatpush1.msra.mxu0 0.0
    %53 = vmatprep.subr.mxu0 0.0
    %54 = vmatpush1.msra.mxu0 0.0
    %55 = vmatprep.subr.mxu0 0.0
    %56 = vmatpush1.msra.mxu0 0.0
    %57 = vmatprep.subr.mxu0 0.0
    %58 = vmatpush1.msra.mxu0 0.0
    %59 = vmatprep.subr.mxu0 0.0
    %60 = vmatpush1.msra.mxu0 0.0
    %61 = vmatprep.subr.mxu0 0.0
    %62 = vmatpush1.msra.mxu0 0.0
    %63 = vmatprep.subr.mxu0 0.0
    %64 = vmatpush1.msra.mxu0 %v27
    %65 = vmatprep.subr.mxu0 0.0
    %66 = vmatpush1.msra.mxu0 %v26
    %67 = vmatprep.subr.mxu0 0.0
    %68 = vmatpush1.msra.mxu0 %v25
    %69 = vmatprep.subr.mxu0 0.0
    %70 = vmatpush1.msra.mxu0 %v24
    %71 = vmatprep.subr.mxu0 0.0
    %72 = vmatpush2.msra.mxu0 0.0
    %73 = vmatprep.subr.mxu0 0.0
    %74 = vmatpush2.msra.mxu0 0.0
    %75 = vmatprep.subr.mxu0 0.0
    %76 = vmatpush2.msra.mxu0 0.0
    %77 = vmatprep.subr.mxu0 0.0
    %78 = vmatpush2.msra.mxu0 0.0
    %79 = vmatprep.subr.mxu0 0.0
    %80 = vmatpush2.msra.mxu0 0.0
    %81 = vmatprep.subr.mxu0 0.0
    %82 = vmatpush2.msra.mxu0 0.0
    %83 = vmatprep.subr.mxu0 0.0
    %84 = vmatpush2.msra.mxu0 0.0
    %85 = vmatprep.subr.mxu0 0.0
    %86 = vmatpush2.msra.mxu0 0.0
    %87 = vmatprep.subr.mxu0 0.0
    %88 = vmatpush2.msra.mxu0 0.0
    %89 = vmatprep.subr.mxu0 0.0
    %90 = vmatpush2.msra.mxu0 0.0
    %91 = vmatprep.subr.mxu0 0.0
    %92 = vmatpush2.msra.mxu0 0.0
    %93 = vmatprep.subr.mxu0 0.0
    %94 = vmatpush2.msra.mxu0 0.0
    %95 = vmatprep.subr.mxu0 0.0
    %96 = vmatpush2.msra.mxu0 0.0
    %97 = vmatprep.subr.mxu0 0.0
    %98 = vmatpush2.msra.mxu0 0.0
    %99 = vmatprep.subr.mxu0 0.0
    %100 = vmatpush2.msra.mxu0 0.0
    %101 = vmatprep.subr.mxu0 0.0
    %102 = vmatpush2.msra.mxu0 0.0
    %103 = vmatprep.mubr.f32.mxu0 0.0
    %104 = vmatmul.mubr.f32.gmra.mxu0 %v37
    %v105 = vpop.f32.mrf.mxu0
    %v106 = vadd.f32 %v33, %v105
    %v107 = vpop.f32.mrf.mxu0
    %108 = vdwg.mxu0
    %v109 = vmax.f32 %v106, 0.0
    %v110 = vld [vmem:[%s3] sm:$0x1]
    %v111 = vld [vmem:[#allocation2] sm:$0x1]
    %113 = vset.pattern.permute.xlu0 0
    %114 = vperm.xlu0 %113, %v111
    %v115 = vpop.permute.xlu0 %114
    %v117 = vlaneseq
    %v118 = vshrl.u32 %v117, 7
    %v119 = vsub.s32 0, %v118
    %v120 = vrot.slane %v115, %v119
    %vm121 = vcmask 162816
    %v123 = vsel %vm121, %v110, 0
    %v126 = vsel %vm121, %v109, 0
    %128 = vmatprep.subr.mxu0 0.0
    %129 = vmatpush1.xpose.msra.mxu0 0.0
    %130 = vmatprep.subr.mxu0 0.0
    %131 = vmatpush1.xpose.msra.mxu0 0.0
    %132 = vmatprep.subr.mxu0 0.0
    %133 = vmatpush1.xpose.msra.mxu0 0.0
    %134 = vmatprep.subr.mxu0 0.0
    %135 = vmatpush1.xpose.msra.mxu0 0.0
    %136 = vmatprep.subr.mxu0 0.0
    %137 = vmatpush1.xpose.msra.mxu0 0.0
    %138 = vmatprep.subr.mxu0 0.0
    %139 = vmatpush1.xpose.msra.mxu0 0.0
    %140 = vmatprep.subr.mxu0 0.0
    %141 = vmatpush1.xpose.msra.mxu0 0.0
    %142 = vmatprep.subr.mxu0 0.0
    %143 = vmatpush1.xpose.msra.mxu0 0.0
    %144 = vmatprep.subr.mxu0 0.0
    %145 = vmatpush1.xpose.msra.mxu0 0.0
    %146 = vmatprep.subr.mxu0 0.0
    %147 = vmatpush1.xpose.msra.mxu0 0.0
    %148 = vmatprep.subr.mxu0 0.0
    %149 = vmatpush1.xpose.msra.mxu0 0.0
    %150 = vmatprep.subr.mxu0 0.0
    %151 = vmatpush1.xpose.msra.mxu0 0.0
    %152 = vmatprep.subr.mxu0 0.0
    %153 = vmatpush1.xpose.msra.mxu0 0.0
    %154 = vmatprep.subr.mxu0 0.0
    %155 = vmatpush1.xpose.msra.mxu0 0.0
    %156 = vmatprep.subr.mxu0 0.0
    %157 = vmatpush1.xpose.msra.mxu0 0.0
    %158 = vmatprep.subr.mxu0 0.0
    %159 = vmatpush1.xpose.msra.mxu0 %v126
    %160 = vmatprep.subr.mxu0 0.0
    %161 = vmatpush2.xpose.msra.mxu0 0.0
    %162 = vmatprep.subr.mxu0 0.0
    %163 = vmatpush2.xpose.msra.mxu0 0.0
    %164 = vmatprep.subr.mxu0 0.0
    %165 = vmatpush2.xpose.msra.mxu0 0.0
    %166 = vmatprep.subr.mxu0 0.0
    %167 = vmatpush2.xpose.msra.mxu0 0.0
    %168 = vmatprep.subr.mxu0 0.0
    %169 = vmatpush2.xpose.msra.mxu0 0.0
    %170 = vmatprep.subr.mxu0 0.0
    %171 = vmatpush2.xpose.msra.mxu0 0.0
    %172 = vmatprep.subr.mxu0 0.0
    %173 = vmatpush2.xpose.msra.mxu0 0.0
    %174 = vmatprep.subr.mxu0 0.0
    %175 = vmatpush2.xpose.msra.mxu0 0.0
    %176 = vmatprep.subr.mxu0 0.0
    %177 = vmatpush2.xpose.msra.mxu0 0.0
    %178 = vmatprep.subr.mxu0 0.0
    %179 = vmatpush2.xpose.msra.mxu0 0.0
    %180 = vmatprep.subr.mxu0 0.0
    %181 = vmatpush2.xpose.msra.mxu0 0.0
    %182 = vmatprep.subr.mxu0 0.0
    %183 = vmatpush2.xpose.msra.mxu0 0.0
    %184 = vmatprep.subr.mxu0 0.0
    %185 = vmatpush2.xpose.msra.mxu0 0.0
    %186 = vmatprep.subr.mxu0 0.0
    %187 = vmatpush2.xpose.msra.mxu0 0.0
    %188 = vmatprep.subr.mxu0 0.0
    %189 = vmatpush2.xpose.msra.mxu0 0.0
    %190 = vmatprep.subr.mxu0 0.0
    %191 = vmatpush2.xpose.msra.mxu0 0.0
    %192 = vmatprep.mubr.f32.mxu0 0.0
    %193 = vmatmul.mubr.f32.gmra.mxu0 %v123
    %v194 = vpop.f32.mrf.mxu0
    %v195 = vadd.f32 %v120, %v194
    %v196 = vpop.f32.mrf.mxu0
    %197 = vdwg.mxu0
    %vm198 = vcmask 57344
    %199 = vst.msk [vmem:[#allocation3] sm:$0x1] %vm198, %v195
    // Predicated region
    $region22: #{tpu_custom_call.1} parent=1 // pred_check
      _
    $region23: #{tpu_custom_call.1} parent=1 // pred_check_branch
      %201 = sbr.rel (0) target = $region25
    $region24: #{tpu_custom_call.1} parent=1 // pred_region
      %s203 = ssub.s32 16, 16
      %204 = vsyncadd [#allocation4], %s203
      %s206 = sshll.u32 [#allocation3], 4
      %s207 = int_to_ptr.vmem [resolvable:$true] %s206
      %209 = dma.vmem_to_hbm [thread:$0]  %s207, 16, %s5, [#allocation4]
    $region25: #{tpu_custom_call.1} parent=1 // pred_fallthru
      _
    // Predicated region
    $region26: #{tpu_custom_call.1} parent=1 // pred_check
      _
    $region27: #{tpu_custom_call.1} parent=1 // pred_check_branch
      %211 = sbr.rel (0) target = $region29
    $region28: #{tpu_custom_call.1} parent=1 // pred_region
      %212 = dma.done [#allocation4], 16
    $region29: #{tpu_custom_call.1} parent=1 // pred_fallthru
      _
    %213 = vsyncpa [#allocation4], 1

</llo_original>
